<compile_context>
chip_gen: v5e
topology: v5e:2x2
jax: 0.10.0
libtpu: 0.0.40
codegen_flags: <defaults>
</compile_context>

<pallas_src>
import math

import jax
import jax.numpy as jnp
from jax.experimental import pallas as pl
from jax.experimental.pallas import tpu as pltpu


def critic_kernel(t_ref, a_ref,
                  w1_ref, b1_ref,
                  w2_ref, wa_ref, b2a_ref,
                  wav_ref, bav_ref,
                  o_ref):
    # ----- state branch: Linear(input_dims, 512) -> ReLU (bf16 MXU, f32 acc)
    tb = t_ref[...].astype(jnp.bfloat16)
    h = jnp.dot(tb, w1_ref[...], preferred_element_type=jnp.float32)
    h = jnp.maximum(h + b1_ref[...], 0.0)

    # ----- state-value + action-value branches, summed before the ReLU.
    # Two separate dots (no lane-unaligned concat):
    #   relu((h @ W2 + b2) + (a @ Wa + ba)) == relu(h @ W2 + a @ Wa + (b2 + ba))
    sv = jnp.dot(h.astype(jnp.bfloat16), w2_ref[...],
                 preferred_element_type=jnp.float32)
    av = jnp.dot(a_ref[...].astype(jnp.bfloat16), wa_ref[...],
                 preferred_element_type=jnp.float32)
    sav = jnp.maximum(sv + av + b2a_ref[...], 0.0)

    # ----- final Linear(256, 1) as an f32 lane reduction (VPU/XLU, not an N=1
    # MXU matmul), emitted as a lane-dense (1, bm) row per tile.
    out = jnp.sum(sav * wav_ref[...], axis=-1) + bav_ref[0, 0]    # (bm,)
    o_ref[...] = out[None, :].astype(o_ref.dtype)                 # (1, bm)


def prepare_critic_params(params):
    """One-time parameter packing (call once at init, NOT per forward):
       - weights cast to bf16 (halves weight DMA; native MXU input dtype),
         an intentional numerics deviation vs. the f32 PyTorch reference
       - b2 + ba pre-summed into a single (1, 256) bias row
       - (256, 1) output weight flattened to a (1, 256) f32 row (lane reduce)
       - bav kept as a (1, 1) f32 scalar destined for SMEM
    """
    w1, b1, w2, b2, wa, ba, wav, bav = params
    return (
        w1.astype(jnp.bfloat16),                        # (input_dims, 512)
        b1.reshape(1, -1).astype(jnp.float32),          # (1, 512)
        w2.astype(jnp.bfloat16),                        # (512, 256)
        wa.astype(jnp.bfloat16),                        # (num_actions, 256)
        (b2 + ba).reshape(1, -1).astype(jnp.float32),   # (1, 256)
        wav.reshape(1, -1).astype(jnp.float32),         # (1, 256)
        bav.reshape(1, 1).astype(jnp.float32),          # (1, 1)  -> SMEM
    )


def _pick_batch_tile(B, max_bm=1024):
    """Batch tile selection.
       - Small batches (<= 256) run as a single full-batch tile (block == full
         array dims is always legal).
       - Larger batches use large multiple-of-128 tiles (per-grid-step pipeline
         overhead ~0.35us dwarfs a 128/256-row tile's compute), capped at 1024,
         and sized so there are always >= 2 grid programs so the "parallel"
         batch axis can be split across v7x's two TensorCores.
    """
    if B <= 256:
        return B
    bm = (B // 2) // 128 * 128
    return max(128, min(max_bm, bm))


def critic_forward(t, a, prepared_params):
    """Critic forward as a single weight-stationary, batch-tiled Pallas kernel."""
    w1, b1, w2, wa, b2a, wav_row, bav = prepared_params
    B, input_dims = t.shape
    num_actions = a.shape[1]

    bm = _pick_batch_tile(B)
    num_tiles = pl.cdiv(B, bm)          # ragged batches -> masked partial block
    padded_b = num_tiles * bm

    # Weight blocks always map to block (0, 0): DMA'd into VMEM once and kept
    # resident while batch tiles stream through the pipeline.
    def stationary(shape):
        return pl.BlockSpec(shape, lambda i: (0, 0))

    flops = 2 * B * (input_dims * 512 + 512 * 256 + num_actions * 256 + 256)
    args = (t, a, w1, b1, w2, wa, b2a, wav_row, bav)
    bytes_accessed = sum(int(x.size) * x.dtype.itemsize for x in args) + B * 4

    out_row = pl.pallas_call(
        critic_kernel,
        out_shape=jax.ShapeDtypeStruct((1, padded_b), jnp.float32),
        grid=(num_tiles,),
        in_specs=[
            pl.BlockSpec((bm, input_dims), lambda i: (i, 0)),    # t  (batch tile)
            pl.BlockSpec((bm, num_actions), lambda i: (i, 0)),   # a  (batch tile)
            stationary(w1.shape),                                 # W1
            stationary(b1.shape),                                 # b1
            stationary(w2.shape),                                 # W2
            stationary(wa.shape),                                 # Wa
            stationary(b2a.shape),                                # b2 + ba
            stationary(wav_row.shape),                            # Wav row
            pl.BlockSpec(memory_space=pltpu.MemorySpace.SMEM),    # bav scalar
        ],
        # Lane-dense output: one (1, bm) row per grid step.
        out_specs=pl.BlockSpec((1, bm), lambda i: (0, i)),
        compiler_params=pltpu.CompilerParams(
            dimension_semantics=("parallel",)),
        cost_estimate=pl.CostEstimate(
            flops=flops, transcendentals=0, bytes_accessed=bytes_accessed),
    )(*args)

    # Drop padded columns (garbage rows from the masked partial last block) and
    # restore the PyTorch (B, 1) shape.
    return out_row[0, :B].reshape(B, 1)


def init_linear(key, fan_in, fan_out):
    """Deterministic PyTorch-style (kaiming-uniform) init; weight stored as (in, out)."""
    kw, kb = jax.random.split(key)
    bound = 1.0 / math.sqrt(fan_in)
    w = jax.random.uniform(kw, (fan_in, fan_out), jnp.float32, -bound, bound)
    b = jax.random.uniform(kb, (fan_out,), jnp.float32, -bound, bound)
    return w, b


def critic_reference(t, a, params):
    """Pure-JAX f32 reference of the PyTorch forward."""
    (w1, b1, w2, b2, wa, ba, wav, bav) = params
    h = jax.nn.relu(t @ w1 + b1)
    sv = h @ w2 + b2
    av = a @ wa + ba
    sav = jax.nn.relu(sv + av)
    return sav @ wav + bav


if __name__ == "__main__":
    # Small shapes consistent with the module: input_dims=32, num_actions=8, batch=8
    B, INPUT_DIMS, NUM_ACTIONS = 8, 32, 8

    key = jax.random.PRNGKey(0)
    k_t, k_a, k1, k2, k3, k4 = jax.random.split(key, 6)

    t = jax.random.normal(k_t, (B, INPUT_DIMS), jnp.float32)
    a = jax.random.normal(k_a, (B, NUM_ACTIONS), jnp.float32)

    w1, b1 = init_linear(k1, INPUT_DIMS, 512)    # V_fc1
    w2, b2 = init_linear(k2, 512, 256)           # V_fc2
    wa, ba = init_linear(k3, NUM_ACTIONS, 256)   # A_fc1
    wav, bav = init_linear(k4, 256, 1)           # AV_fc
    params = (w1, b1, w2, b2, wa, ba, wav, bav)

    prepared = prepare_critic_params(params)     # one-time packing / bf16 cast

    # 1) Tiny-batch path (single tile, grid=1).
    out = jax.block_until_ready(critic_forward(t, a, prepared))
    ref = critic_reference(t, a, params)
    assert out.shape == (B, 1), out.shape
    # bf16 weights -> loosened tolerance vs. the f32 reference (intentional).
    assert bool(jnp.allclose(out, ref, atol=5e-2, rtol=5e-2)), (
        f"max abs err = {jnp.max(jnp.abs(out - ref))}")

    # 2) Multi-tile / ragged-batch path (grid > 1, masked partial last block).
    B2 = 300
    t2 = jax.random.normal(k_t, (B2, INPUT_DIMS), jnp.float32)
    a2 = jax.random.normal(k_a, (B2, NUM_ACTIONS), jnp.float32)
    out2 = jax.block_until_ready(critic_forward(t2, a2, prepared))
    ref2 = critic_reference(t2, a2, params)
    assert out2.shape == (B2, 1), out2.shape
    assert bool(jnp.allclose(out2, ref2, atol=5e-2, rtol=5e-2)), (
        f"max abs err = {jnp.max(jnp.abs(out2 - ref2))}")

    # TODO(synk): optimizer (Adam) / MSELoss are training-side and not part of
    # the forward pass; not implemented as kernels.
    print("KERNEL_OK")
</pallas_src>

<mosaic_0001>
module attributes {stable_mosaic.version = 11 : i64} {
  func.func @critic_kernel(%arg0: i32, %arg1: memref<8x32xf32, #tpu.memory_space<vmem>>, %arg2: memref<8x8xf32, #tpu.memory_space<vmem>>, %arg3: memref<32x512xbf16, #tpu.memory_space<vmem>>, %arg4: memref<1x512xf32, #tpu.memory_space<vmem>>, %arg5: memref<512x256xbf16, #tpu.memory_space<vmem>>, %arg6: memref<8x256xbf16, #tpu.memory_space<vmem>>, %arg7: memref<1x256xf32, #tpu.memory_space<vmem>>, %arg8: memref<1x256xf32, #tpu.memory_space<vmem>>, %arg9: memref<1x1xf32, #tpu.memory_space<smem>>, %arg10: memref<1x8xf32, #tpu.memory_space<vmem>>) attributes {dimension_semantics = [#tpu.dimension_semantics<parallel>], iteration_bounds = array<i64: 1>, scalar_prefetch = 0 : i64, scratch_operands = 0 : i64, tpu.core_type = #tpu.core_type<tc>, window_params = [{transform_indices = @transform_0, window_bounds = array<i64: 8, 32>}, {transform_indices = @transform_1, window_bounds = array<i64: 8, 8>}, {pipeline_mode = #tpu.pipeline_mode<synchronous>, transform_indices = @transform_2, window_bounds = array<i64: 32, 512>}, {pipeline_mode = #tpu.pipeline_mode<synchronous>, transform_indices = @transform_3, window_bounds = array<i64: 1, 512>}, {pipeline_mode = #tpu.pipeline_mode<synchronous>, transform_indices = @transform_4, window_bounds = array<i64: 512, 256>}, {pipeline_mode = #tpu.pipeline_mode<synchronous>, transform_indices = @transform_5, window_bounds = array<i64: 8, 256>}, {pipeline_mode = #tpu.pipeline_mode<synchronous>, transform_indices = @transform_6, window_bounds = array<i64: 1, 256>}, {pipeline_mode = #tpu.pipeline_mode<synchronous>, transform_indices = @transform_7, window_bounds = array<i64: 1, 256>}, {transform_indices = @transform_8, window_bounds = array<i64: 1, 1>}, {transform_indices = @transform_9, window_bounds = array<i64: 1, 8>}]} {
    %c0 = arith.constant 0 : index
    %c0_0 = arith.constant 0 : index
    %0 = vector.load %arg1[%c0, %c0_0] : memref<8x32xf32, #tpu.memory_space<vmem>>, vector<8x32xf32>
    %1 = arith.truncf %0 : vector<8x32xf32> to vector<8x32xbf16>
    %c0_1 = arith.constant 0 : index
    %c0_2 = arith.constant 0 : index
    %2 = vector.load %arg3[%c0_1, %c0_2] : memref<32x512xbf16, #tpu.memory_space<vmem>>, vector<32x512xbf16>
    %cst = arith.constant dense<0.000000e+00> : vector<8x512xf32>
    %3 = tpu.matmul %1, %2, %cst {dimension_numbers = #tpu.dot_dimension_numbers<[1], [0], [0], [1], [0, 0, 1, 1], [], []>} : vector<8x32xbf16>, vector<32x512xbf16>, vector<8x512xf32> -> vector<8x512xf32>
    %c0_3 = arith.constant 0 : index
    %c0_4 = arith.constant 0 : index
    %4 = vector.load %arg4[%c0_3, %c0_4] : memref<1x512xf32, #tpu.memory_space<vmem>>, vector<1x512xf32>
    %5 = vector.broadcast %4 : vector<1x512xf32> to vector<8x512xf32>
    %6 = arith.addf %3, %5 : vector<8x512xf32>
    %cst_5 = arith.constant 0.000000e+00 : f32
    %7 = vector.broadcast %cst_5 : f32 to vector<8x512xf32>
    %8 = arith.maximumf %6, %7 : vector<8x512xf32>
    %9 = arith.truncf %8 : vector<8x512xf32> to vector<8x512xbf16>
    %c0_6 = arith.constant 0 : index
    %c0_7 = arith.constant 0 : index
    %10 = vector.load %arg5[%c0_6, %c0_7] : memref<512x256xbf16, #tpu.memory_space<vmem>>, vector<512x256xbf16>
    %cst_8 = arith.constant dense<0.000000e+00> : vector<8x256xf32>
    %11 = tpu.matmul %9, %10, %cst_8 {dimension_numbers = #tpu.dot_dimension_numbers<[1], [0], [0], [1], [0, 0, 1, 1], [], []>} : vector<8x512xbf16>, vector<512x256xbf16>, vector<8x256xf32> -> vector<8x256xf32>
    %c0_9 = arith.constant 0 : index
    %c0_10 = arith.constant 0 : index
    %12 = vector.load %arg2[%c0_9, %c0_10] : memref<8x8xf32, #tpu.memory_space<vmem>>, vector<8x8xf32>
    %13 = arith.truncf %12 : vector<8x8xf32> to vector<8x8xbf16>
    %c0_11 = arith.constant 0 : index
    %c0_12 = arith.constant 0 : index
    %14 = vector.load %arg6[%c0_11, %c0_12] : memref<8x256xbf16, #tpu.memory_space<vmem>>, vector<8x256xbf16>
    %cst_13 = arith.constant dense<0.000000e+00> : vector<8x256xf32>
    %15 = tpu.matmul %13, %14, %cst_13 {dimension_numbers = #tpu.dot_dimension_numbers<[1], [0], [0], [1], [0, 0, 1, 1], [], []>} : vector<8x8xbf16>, vector<8x256xbf16>, vector<8x256xf32> -> vector<8x256xf32>
    %16 = arith.addf %11, %15 : vector<8x256xf32>
    %c0_14 = arith.constant 0 : index
    %c0_15 = arith.constant 0 : index
    %17 = vector.load %arg7[%c0_14, %c0_15] : memref<1x256xf32, #tpu.memory_space<vmem>>, vector<1x256xf32>
    %18 = vector.broadcast %17 : vector<1x256xf32> to vector<8x256xf32>
    %19 = arith.addf %16, %18 : vector<8x256xf32>
    %cst_16 = arith.constant 0.000000e+00 : f32
    %20 = vector.broadcast %cst_16 : f32 to vector<8x256xf32>
    %21 = arith.maximumf %19, %20 : vector<8x256xf32>
    %c0_17 = arith.constant 0 : index
    %c0_18 = arith.constant 0 : index
    %22 = vector.load %arg8[%c0_17, %c0_18] : memref<1x256xf32, #tpu.memory_space<vmem>>, vector<1x256xf32>
    %23 = vector.broadcast %22 : vector<1x256xf32> to vector<8x256xf32>
    %24 = arith.mulf %21, %23 : vector<8x256xf32>
    %cst_19 = arith.constant dense<0.000000e+00> : vector<8xf32>
    %25 = vector.multi_reduction <add>, %24, %cst_19 [1] : vector<8x256xf32> to vector<8xf32>
    %c0_20 = arith.constant 0 : index
    %c0_21 = arith.constant 0 : index
    %26 = memref.load %arg9[%c0_20, %c0_21] : memref<1x1xf32, #tpu.memory_space<smem>>
    %27 = vector.broadcast %26 : f32 to vector<8xf32>
    %28 = arith.addf %25, %27 : vector<8xf32>
    %29 = vector.shape_cast %28 : vector<8xf32> to vector<1x8xf32>
    %c0_22 = arith.constant 0 : index
    %c0_23 = arith.constant 0 : index
    %30 = vector.load %arg10[%c0_22, %c0_23] : memref<1x8xf32, #tpu.memory_space<vmem>>, vector<1x8xf32>
    tpu.vector_store %arg10[%c0_22, %c0_23], %29 {strides = array<i32>} : memref<1x8xf32, #tpu.memory_space<vmem>>, vector<1x8xf32>,
    return
  }
  func.func @transform_0(%arg0: i32) -> (i32, i32) {
    %c0_i32 = arith.constant 0 : i32
    %c0_i32_0 = arith.constant 0 : i32
    return %arg0, %c0_i32 : i32, i32
  }
  func.func @transform_1(%arg0: i32) -> (i32, i32) {
    %c0_i32 = arith.constant 0 : i32
    %c0_i32_0 = arith.constant 0 : i32
    return %arg0, %c0_i32 : i32, i32
  }
  func.func @transform_2(%arg0: i32) -> (i32, i32) {
    %c0_i32 = arith.constant 0 : i32
    %c0_i32_0 = arith.constant 0 : i32
    %c0_i32_1 = arith.constant 0 : i32
    return %c0_i32, %c0_i32_0 : i32, i32
  }
  func.func @transform_3(%arg0: i32) -> (i32, i32) {
    %c0_i32 = arith.constant 0 : i32
    %c0_i32_0 = arith.constant 0 : i32
    %c0_i32_1 = arith.constant 0 : i32
    return %c0_i32, %c0_i32_0 : i32, i32
  }
  func.func @transform_4(%arg0: i32) -> (i32, i32) {
    %c0_i32 = arith.constant 0 : i32
    %c0_i32_0 = arith.constant 0 : i32
    %c0_i32_1 = arith.constant 0 : i32
    return %c0_i32, %c0_i32_0 : i32, i32
  }
  func.func @transform_5(%arg0: i32) -> (i32, i32) {
    %c0_i32 = arith.constant 0 : i32
    %c0_i32_0 = arith.constant 0 : i32
    %c0_i32_1 = arith.constant 0 : i32
    return %c0_i32, %c0_i32_0 : i32, i32
  }
  func.func @transform_6(%arg0: i32) -> (i32, i32) {
    %c0_i32 = arith.constant 0 : i32
    %c0_i32_0 = arith.constant 0 : i32
    %c0_i32_1 = arith.constant 0 : i32
    return %c0_i32, %c0_i32_0 : i32, i32
  }
  func.func @transform_7(%arg0: i32) -> (i32, i32) {
    %c0_i32 = arith.constant 0 : i32
    %c0_i32_0 = arith.constant 0 : i32
    %c0_i32_1 = arith.constant 0 : i32
    return %c0_i32, %c0_i32_0 : i32, i32
  }
  func.func @transform_8(%arg0: i32) -> (i32, i32) {
    %c0_i32 = arith.constant 0 : i32
    %c0_i32_0 = arith.constant 0 : i32
    %c0_i32_1 = arith.constant 0 : i32
    return %c0_i32, %c0_i32_0 : i32, i32
  }
  func.func @transform_9(%arg0: i32) -> (i32, i32) {
    %c0_i32 = arith.constant 0 : i32
    %c0_i32_0 = arith.constant 0 : i32
    return %c0_i32, %arg0 : i32, i32
  }
}

</mosaic_0001>

<llo_original>
// kernel: tpu_custom_call.1
$region0: #{tpu_custom_call.1}
  #allocation0 [shape = 'u32[]', space=smem, size = 0x4, offset = 0x4, fixed_abs, tag = 'smem constant byte address 0x4 - core index']
  #allocation1 [shape = 'u32[72,128]{1,0:T(1,128)}', space=vmem, size = 0x9000, scoped, tag = 'internal scratch']
  #allocation2 [shape = 'f32[1,1]{1,0:T(1,128)S(6)}', space=smem, size = 0x200, scoped, tag = 'scoped memory for tpu_custom_call.1']
  %s0 = inlined_call_operand.hbm [shape: f32[8,32], index: 0, kind: input, shape index: {}]
  %s1 = inlined_call_operand.hbm [shape: f32[8,8], index: 1, kind: input, shape index: {}]
  %s2 = inlined_call_operand.hbm [shape: bf16[32,512], index: 2, kind: input, shape index: {}]
  %s3 = inlined_call_operand.vmem [shape: f32[1,512], index: 3, kind: input, shape index: {}]
  %s4 = inlined_call_operand.hbm [shape: bf16[512,256], index: 4, kind: input, shape index: {}]
  %s5 = inlined_call_operand.hbm [shape: bf16[8,256], index: 5, kind: input, shape index: {}]
  %s6 = inlined_call_operand.vmem [shape: f32[1,256], index: 6, kind: input, shape index: {}]
  %s7 = inlined_call_operand.vmem [shape: f32[1,256], index: 7, kind: input, shape index: {}]
  %s8 = inlined_call_operand.<no memory space> [shape: f32[1,1], index: 8, kind: input, shape index: {}]
  %s9 = inlined_call_operand.hbm [shape: f32[1,8], index: 9, kind: output, shape index: {}]
  %s10 = sld [smem:[#allocation0]]
  $region66: #{tpu_custom_call.1} parent=0
    _
  %s12 = ssub.s32 1, %s10
  %s13 = scalar_select 0, %s12, %s10
  %14 = sst [smem:[#allocation2]] %s8
  $region1: #{tpu_custom_call.1} parent=0
    #allocation3 [shape = 'u8[4096]{0}', space=vmem, size = 0x1000, scoped, tag = 'input window, operand 0, single buffered']
    #allocation4 [shape = 's32[1]{0}', space=sflag, size = 0x4, scoped, tag = 'scoped memory for tpu_custom_call.1']
    #allocation5 [shape = 's32[1]{0}', space=sflag, size = 0x4, scoped, tag = 'scoped memory for tpu_custom_call.1']
    #allocation6 [shape = 'u8[4096]{0}', space=vmem, size = 0x1000, scoped, tag = 'input window, operand 1, single buffered']
    #allocation7 [shape = 's32[1]{0}', space=sflag, size = 0x4, scoped, tag = 'scoped memory for tpu_custom_call.1']
    #allocation8 [shape = 'u8[32768]{0}', space=vmem, size = 0x8000, scoped, tag = 'input window, operand 2, single buffered']
    #allocation9 [shape = 'u8[262144]{0}', space=vmem, size = 0x40000, scoped, tag = 'input window, operand 4, single buffered']
    #allocation10 [shape = 's32[1]{0}', space=sflag, size = 0x4, scoped, tag = 'scoped memory for tpu_custom_call.1']
    #allocation11 [shape = 'u8[4096]{0}', space=vmem, size = 0x1000, scoped, tag = 'input window, operand 5, single buffered']
    #allocation12 [shape = 'u8[512]{0}', space=vmem, size = 0x400, scoped, tag = 'output window, operand 0, single buffered']
    %15 = vsyncpa [#allocation4], 0
    %16 = vsyncpa [#allocation7], 0
    %17 = vsyncpa [#allocation10], 0
    %18 = vsyncpa [#allocation5], 0
    // Predicated region
    $region2: #{tpu_custom_call.1} parent=1 // pred_check
      _
    $region3: #{tpu_custom_call.1} parent=1 // pred_check_branch
      %20 = sbr.rel (0) target = $region5
    $region4: #{tpu_custom_call.1} parent=1 // pred_region
      %22 = vsyncadd [#allocation4], 0
      %s24 = sshll.u32 %s0, 4
      %s25 = int_to_ptr.hbm [resolvable:$true] %s24
      %s26 = sshll.u32 [#allocation3], 4
      %s27 = int_to_ptr.vmem [resolvable:$true] %s26
      %29 = dma.hbm_to_vmem [thread:$0]  %s25, 128, %s27, [#allocation4]
    $region5: #{tpu_custom_call.1} parent=1 // pred_fallthru
      _
    // Predicated region
    $region6: #{tpu_custom_call.1} parent=1 // pred_check
      _
    $region7: #{tpu_custom_call.1} parent=1 // pred_check_branch
      %31 = sbr.rel (0) target = $region9
    $region8: #{tpu_custom_call.1} parent=1 // pred_region
      %33 = vsyncadd [#allocation7], 0
      %s35 = sshll.u32 %s1, 4
      %s36 = int_to_ptr.hbm [resolvable:$true] %s35
      %s37 = sshll.u32 [#allocation6], 4
      %s38 = int_to_ptr.vmem [resolvable:$true] %s37
      %40 = dma.hbm_to_vmem [thread:$0]  %s36, 128, %s38, [#allocation7]
    $region9: #{tpu_custom_call.1} parent=1 // pred_fallthru
      _
    // Predicated region
    $region10: #{tpu_custom_call.1} parent=1 // pred_check
      _
    $region11: #{tpu_custom_call.1} parent=1 // pred_check_branch
      %42 = sbr.rel (0) target = $region13
    $region12: #{tpu_custom_call.1} parent=1 // pred_region
      %44 = vsyncadd [#allocation7], 0
      %s45 = sshll.u32 %s2, 4
      %s46 = int_to_ptr.hbm [resolvable:$true] %s45
      %s47 = sshll.u32 [#allocation8], 4
      %s48 = int_to_ptr.vmem [resolvable:$true] %s47
      %53 = dma.hbm_to_vmem [thread:$0]  %s46, 1024, %s48, [#allocation7], 256, 256, 16
    $region13: #{tpu_custom_call.1} parent=1 // pred_fallthru
      _
    // Predicated region
    $region14: #{tpu_custom_call.1} parent=1 // pred_check
      _
    $region15: #{tpu_custom_call.1} parent=1 // pred_check_branch
      %55 = sbr.rel (0) target = $region17
    $region16: #{tpu_custom_call.1} parent=1 // pred_region
      _
    $region17: #{tpu_custom_call.1} parent=1 // pred_fallthru
      _
    // Predicated region
    $region18: #{tpu_custom_call.1} parent=1 // pred_check
      _
    $region19: #{tpu_custom_call.1} parent=1 // pred_check_branch
      %57 = sbr.rel (0) target = $region21
    $region20: #{tpu_custom_call.1} parent=1 // pred_region
      %59 = vsyncadd [#allocation10], 0
      %s60 = sshll.u32 %s4, 4
      %s61 = int_to_ptr.hbm [resolvable:$true] %s60
      %s62 = sshll.u32 [#allocation9], 4
      %s63 = int_to_ptr.vmem [resolvable:$true] %s62
      %68 = dma.hbm_to_vmem [thread:$0]  %s61, 8192, %s63, [#allocation10], 128, 128, 8
    $region21: #{tpu_custom_call.1} parent=1 // pred_fallthru
      _
    // Predicated region
    $region22: #{tpu_custom_call.1} parent=1 // pred_check
      _
    $region23: #{tpu_custom_call.1} parent=1 // pred_check_branch
      %70 = sbr.rel (0) target = $region25
    $region24: #{tpu_custom_call.1} parent=1 // pred_region
      %72 = vsyncadd [#allocation10], 0
      %s74 = sshll.u32 %s5, 4
      %s75 = int_to_ptr.hbm [resolvable:$true] %s74
      %s76 = sshll.u32 [#allocation11], 4
      %s77 = int_to_ptr.vmem [resolvable:$true] %s76
      %79 = dma.hbm_to_vmem [thread:$0]  %s75, 128, %s77, [#allocation10]
    $region25: #{tpu_custom_call.1} parent=1 // pred_fallthru
      _
    // Predicated region
    $region26: #{tpu_custom_call.1} parent=1 // pred_check
      _
    $region27: #{tpu_custom_call.1} parent=1 // pred_check_branch
      %81 = sbr.rel (0) target = $region29
    $region28: #{tpu_custom_call.1} parent=1 // pred_region
      _
    $region29: #{tpu_custom_call.1} parent=1 // pred_fallthru
      _
    // Predicated region
    $region30: #{tpu_custom_call.1} parent=1 // pred_check
      _
    $region31: #{tpu_custom_call.1} parent=1 // pred_check_branch
      %83 = sbr.rel (0) target = $region33
    $region32: #{tpu_custom_call.1} parent=1 // pred_region
      _
    $region33: #{tpu_custom_call.1} parent=1 // pred_fallthru
      _
    // Predicated region
    $region34: #{tpu_custom_call.1} parent=1 // pred_check
      _
    $region35: #{tpu_custom_call.1} parent=1 // pred_check_branch
      %85 = sbr.rel (0) target = $region37
    $region36: #{tpu_custom_call.1} parent=1 // pred_region
      _
    $region37: #{tpu_custom_call.1} parent=1 // pred_fallthru
      _
    // Predicated region
    $region38: #{tpu_custom_call.1} parent=1 // pred_check
      _
    $region39: #{tpu_custom_call.1} parent=1 // pred_check_branch
      %87 = sbr.rel (0) target = $region41
    $region40: #{tpu_custom_call.1} parent=1 // pred_region
      %89 = dma.done [#allocation4], 128
    $region41: #{tpu_custom_call.1} parent=1 // pred_fallthru
      _
    // Predicated region
    $region42: #{tpu_custom_call.1} parent=1 // pred_check
      _
    $region43: #{tpu_custom_call.1} parent=1 // pred_check_branch
      %91 = sbr.rel (0) target = $region45
    $region44: #{tpu_custom_call.1} parent=1 // pred_region
      %93 = dma.done [#allocation7], 128
    $region45: #{tpu_custom_call.1} parent=1 // pred_fallthru
      _
    // Predicated region
    $region46: #{tpu_custom_call.1} parent=1 // pred_check
      _
    $region47: #{tpu_custom_call.1} parent=1 // pred_check_branch
      %95 = sbr.rel (0) target = $region49
    $region48: #{tpu_custom_call.1} parent=1 // pred_region
      %97 = dma.done [#allocation7], 1024
    $region49: #{tpu_custom_call.1} parent=1 // pred_fallthru
      _
    // Predicated region
    $region50: #{tpu_custom_call.1} parent=1 // pred_check
      _
    $region51: #{tpu_custom_call.1} parent=1 // pred_check_branch
      %99 = sbr.rel (0) target = $region53
    $region52: #{tpu_custom_call.1} parent=1 // pred_region
      %101 = dma.done [#allocation10], 8192
    $region53: #{tpu_custom_call.1} parent=1 // pred_fallthru
      _
    // Predicated region
    $region54: #{tpu_custom_call.1} parent=1 // pred_check
      _
    $region55: #{tpu_custom_call.1} parent=1 // pred_check_branch
      %103 = sbr.rel (0) target = $region57
    $region56: #{tpu_custom_call.1} parent=1 // pred_region
      %105 = dma.done [#allocation10], 128
    $region57: #{tpu_custom_call.1} parent=1 // pred_fallthru
      _
    %v107 = vld [vmem:[#allocation3] sm:$0xff]
    %v108 = vpack.c.bf16 %v107, %v107
    %v109 = vld [vmem:[#allocation8] sm:$0xff]
    %v110 = vld [vmem:[#allocation8 + $0x8] sm:$0xff]
    %v111 = vld [vmem:[#allocation8 + $0x10] sm:$0xff]
    %v112 = vld [vmem:[#allocation8 + $0x18] sm:$0xff]
    %v113 = vld [vmem:[#allocation8 + $0x20] sm:$0xff]
    %v114 = vld [vmem:[#allocation8 + $0x28] sm:$0xff]
    %v115 = vld [vmem:[#allocation8 + $0x30] sm:$0xff]
    %v116 = vld [vmem:[#allocation8 + $0x38] sm:$0xff]
    %v117 = vld [vmem:[%s3] sm:$0xf]
    %v119 = vperm.slane %v117, 0
    %v120 = vperm.slane %v117, 1
    %v121 = vperm.slane %v117, 2
    %v122 = vperm.slane %v117, 3
    %v135 = vunpack.c.l.b16 %v109
    %v136 = vunpack.c.h.b16 %v109
    %v137 = vunpack.c.l.b16 %v110
    %v138 = vunpack.c.h.b16 %v110
    %v139 = vunpack.c.l.b16 %v111
    %v140 = vunpack.c.h.b16 %v111
    %v141 = vunpack.c.l.b16 %v112
    %v142 = vunpack.c.h.b16 %v112
    %v143 = vunpack.c.l.b16 %v113
    %v144 = vunpack.c.h.b16 %v113
    %v145 = vunpack.c.l.b16 %v114
    %v146 = vunpack.c.h.b16 %v114
    %v147 = vunpack.c.l.b16 %v115
    %v148 = vunpack.c.h.b16 %v115
    %v149 = vunpack.c.l.b16 %v116
    %v150 = vunpack.c.h.b16 %v116
    %v151 = vpack.c.b16 %v139, %v135
    %v152 = vpack.c.b16 %v140, %v136
    %v153 = vpack.c.b16 %v141, %v137
    %v154 = vpack.c.b16 %v142, %v138
    %v155 = vpack.c.b16 %v147, %v143
    %v156 = vpack.c.b16 %v148, %v144
    %v157 = vpack.c.b16 %v149, %v145
    %v158 = vpack.c.b16 %v150, %v146
    %vm167 = vcmask 261120
    %v169 = vsel %vm167, %v108, 0
    %171 = vmatpush.bf16.msra.mxu0 0
    %172 = vmatpush.bf16.msra.mxu0 0
    %173 = vmatpush.bf16.msra.mxu0 0
    %174 = vmatpush.bf16.msra.mxu0 0
    %175 = vmatpush.bf16.msra.mxu0 0
    %176 = vmatpush.bf16.msra.mxu0 0
    %177 = vmatpush.bf16.msra.mxu0 %v155
    %178 = vmatpush.bf16.msra.mxu0 %v151
    %179 = vmatmul.bf16.gmra.mxu0 %v169
    %v180 = vpop.f32.mrf.mxu0
    %v181 = vadd.f32 %v119, %v180
    %v182 = vpop.f32.mrf.mxu0
    %183 = vdwg.mxu0
    %184 = vmatpush.bf16.msra.mxu0 0
    %185 = vmatpush.bf16.msra.mxu0 0
    %186 = vmatpush.bf16.msra.mxu0 0
    %187 = vmatpush.bf16.msra.mxu0 0
    %188 = vmatpush.bf16.msra.mxu0 0
    %189 = vmatpush.bf16.msra.mxu0 0
    %190 = vmatpush.bf16.msra.mxu0 %v156
    %191 = vmatpush.bf16.msra.mxu0 %v152
    %192 = vmatmul.bf16.gmra.mxu0 %v169
    %v193 = vpop.f32.mrf.mxu0
    %v194 = vadd.f32 %v120, %v193
    %v195 = vpop.f32.mrf.mxu0
    %196 = vdwg.mxu0
    %197 = vmatpush.bf16.msra.mxu0 0
    %198 = vmatpush.bf16.msra.mxu0 0
    %199 = vmatpush.bf16.msra.mxu0 0
    %200 = vmatpush.bf16.msra.mxu0 0
    %201 = vmatpush.bf16.msra.mxu0 0
    %202 = vmatpush.bf16.msra.mxu0 0
    %203 = vmatpush.bf16.msra.mxu0 %v157
    %204 = vmatpush.bf16.msra.mxu0 %v153
    %205 = vmatmul.bf16.gmra.mxu0 %v169
    %v206 = vpop.f32.mrf.mxu0
    %v207 = vadd.f32 %v121, %v206
    %v208 = vpop.f32.mrf.mxu0
    %209 = vdwg.mxu0
    %210 = vmatpush.bf16.msra.mxu0 0
    %211 = vmatpush.bf16.msra.mxu0 0
    %212 = vmatpush.bf16.msra.mxu0 0
    %213 = vmatpush.bf16.msra.mxu0 0
    %214 = vmatpush.bf16.msra.mxu0 0
    %215 = vmatpush.bf16.msra.mxu0 0
    %216 = vmatpush.bf16.msra.mxu0 %v158
    %217 = vmatpush.bf16.msra.mxu0 %v154
    %218 = vmatmul.bf16.gmra.mxu0 %v169
    %v219 = vpop.f32.mrf.mxu0
    %v220 = vadd.f32 %v122, %v219
    %v221 = vpop.f32.mrf.mxu0
    %222 = vdwg.mxu0
    %v223 = vmax.f32 %v181, 0.0
    %v224 = vmax.f32 %v194, 0.0
    %v225 = vmax.f32 %v207, 0.0
    %v226 = vmax.f32 %v220, 0.0
    %v227 = vpack.c.bf16 %v223, %v223
    %v228 = vpack.c.bf16 %v224, %v224
    %v229 = vpack.c.bf16 %v225, %v225
    %v230 = vpack.c.bf16 %v226, %v226
    %v231 = vld [vmem:[#allocation9] sm:$0xff]
    %v232 = vld [vmem:[#allocation9 + $0x8] sm:$0xff]
    %v233 = vld [vmem:[#allocation9 + $0x10] sm:$0xff]
    %v234 = vld [vmem:[#allocation9 + $0x18] sm:$0xff]
    %v235 = vld [vmem:[#allocation9 + $0x20] sm:$0xff]
    %v236 = vld [vmem:[#allocation9 + $0x28] sm:$0xff]
    %v237 = vld [vmem:[#allocation9 + $0x30] sm:$0xff]
    %v238 = vld [vmem:[#allocation9 + $0x38] sm:$0xff]
    %v239 = vld [vmem:[#allocation9 + $0x40] sm:$0xff]
    %v240 = vld [vmem:[#allocation9 + $0x48] sm:$0xff]
    %v241 = vld [vmem:[#allocation9 + $0x50] sm:$0xff]
    %v242 = vld [vmem:[#allocation9 + $0x58] sm:$0xff]
    %v243 = vld [vmem:[#allocation9 + $0x60] sm:$0xff]
    %v244 = vld [vmem:[#allocation9 + $0x68] sm:$0xff]
    %v245 = vld [vmem:[#allocation9 + $0x70] sm:$0xff]
    %v246 = vld [vmem:[#allocation9 + $0x78] sm:$0xff]
    %v247 = vld [vmem:[#allocation9 + $0x80] sm:$0xff]
    %v248 = vld [vmem:[#allocation9 + $0x88] sm:$0xff]
    %v249 = vld [vmem:[#allocation9 + $0x90] sm:$0xff]
    %v250 = vld [vmem:[#allocation9 + $0x98] sm:$0xff]
    %v251 = vld [vmem:[#allocation9 + $0xa0] sm:$0xff]
    %v252 = vld [vmem:[#allocation9 + $0xa8] sm:$0xff]
    %v253 = vld [vmem:[#allocation9 + $0xb0] sm:$0xff]
    %v254 = vld [vmem:[#allocation9 + $0xb8] sm:$0xff]
    %v255 = vld [vmem:[#allocation9 + $0xc0] sm:$0xff]
    %v256 = vld [vmem:[#allocation9 + $0xc8] sm:$0xff]
    %v257 = vld [vmem:[#allocation9 + $0xd0] sm:$0xff]
    %v258 = vld [vmem:[#allocation9 + $0xd8] sm:$0xff]
    %v259 = vld [vmem:[#allocation9 + $0xe0] sm:$0xff]
    %v260 = vld [vmem:[#allocation9 + $0xe8] sm:$0xff]
    %v261 = vld [vmem:[#allocation9 + $0xf0] sm:$0xff]
    %v262 = vld [vmem:[#allocation9 + $0xf8] sm:$0xff]
    %v263 = vld [vmem:[#allocation9 + $0x100] sm:$0xff]
    %v264 = vld [vmem:[#allocation9 + $0x108] sm:$0xff]
    %v265 = vld [vmem:[#allocation9 + $0x110] sm:$0xff]
    %v266 = vld [vmem:[#allocation9 + $0x118] sm:$0xff]
    %v267 = vld [vmem:[#allocation9 + $0x120] sm:$0xff]
    %v268 = vld [vmem:[#allocation9 + $0x128] sm:$0xff]
    %v269 = vld [vmem:[#allocation9 + $0x130] sm:$0xff]
    %v270 = vld [vmem:[#allocation9 + $0x138] sm:$0xff]
    %v271 = vld [vmem:[#allocation9 + $0x140] sm:$0xff]
    %v272 = vld [vmem:[#allocation9 + $0x148] sm:$0xff]
    %v273 = vld [vmem:[#allocation9 + $0x150] sm:$0xff]
    %v274 = vld [vmem:[#allocation9 + $0x158] sm:$0xff]
    %v275 = vld [vmem:[#allocation9 + $0x160] sm:$0xff]
    %v276 = vld [vmem:[#allocation9 + $0x168] sm:$0xff]
    %v277 = vld [vmem:[#allocation9 + $0x170] sm:$0xff]
    %v278 = vld [vmem:[#allocation9 + $0x178] sm:$0xff]
    %v279 = vld [vmem:[#allocation9 + $0x180] sm:$0xff]
    %v280 = vld [vmem:[#allocation9 + $0x188] sm:$0xff]
    %v281 = vld [vmem:[#allocation9 + $0x190] sm:$0xff]
    %v282 = vld [vmem:[#allocation9 + $0x198] sm:$0xff]
    %v283 = vld [vmem:[#allocation9 + $0x1a0] sm:$0xff]
    %v284 = vld [vmem:[#allocation9 + $0x1a8] sm:$0xff]
    %v285 = vld [vmem:[#allocation9 + $0x1b0] sm:$0xff]
    %v286 = vld [vmem:[#allocation9 + $0x1b8] sm:$0xff]
    %v287 = vld [vmem:[#allocation9 + $0x1c0] sm:$0xff]
    %v288 = vld [vmem:[#allocation9 + $0x1c8] sm:$0xff]
    %v289 = vld [vmem:[#allocation9 + $0x1d0] sm:$0xff]
    %v290 = vld [vmem:[#allocation9 + $0x1d8] sm:$0xff]
    %v291 = vld [vmem:[#allocation9 + $0x1e0] sm:$0xff]
    %v292 = vld [vmem:[#allocation9 + $0x1e8] sm:$0xff]
    %v293 = vld [vmem:[#allocation9 + $0x1f0] sm:$0xff]
    %v294 = vld [vmem:[#allocation9 + $0x1f8] sm:$0xff]
    %v295 = vld [vmem:[#allocation6] sm:$0xff]
    %v296 = vpack.c.bf16 %v295, %v295
    %v297 = vld [vmem:[#allocation11] sm:$0xff]
    %v299 = vunpack.c.l.b16 %v297
    %v300 = vunpack.c.h.b16 %v297
    %v301 = vpack.c.b16 %v299, %v299
    %v302 = vpack.c.b16 %v300, %v300
    %vm303 = vcmask 64512
    %v305 = vsel %vm303, %v296, 0
    %vm307 = vcmask 1043456
    %v309 = vsel %vm307, %v301, 0
    %v312 = vsel %vm307, %v302, 0
    %314 = vmatpush.bf16.msra.mxu0 0
    %315 = vmatpush.bf16.msra.mxu0 0
    %316 = vmatpush.bf16.msra.mxu0 0
    %317 = vmatpush.bf16.msra.mxu0 0
    %318 = vmatpush.bf16.msra.mxu0 0
    %319 = vmatpush.bf16.msra.mxu0 0
    %320 = vmatpush.bf16.msra.mxu0 0
    %321 = vmatpush.bf16.msra.mxu0 %v309
    %322 = vmatmul.bf16.gmra.mxu0 %v305
    %v323 = vpop.f32.mrf.mxu0
    %v324 = vadd.f32 0.0, %v323
    %v325 = vpop.f32.mrf.mxu0
    %326 = vdwg.mxu0
    %327 = vmatpush.bf16.msra.mxu0 0
    %328 = vmatpush.bf16.msra.mxu0 0
    %329 = vmatpush.bf16.msra.mxu0 0
    %330 = vmatpush.bf16.msra.mxu0 0
    %331 = vmatpush.bf16.msra.mxu0 0
    %332 = vmatpush.bf16.msra.mxu0 0
    %333 = vmatpush.bf16.msra.mxu0 0
    %334 = vmatpush.bf16.msra.mxu0 %v312
    %335 = vmatmul.bf16.gmra.mxu0 %v305
    %v336 = vpop.f32.mrf.mxu0
    %v337 = vadd.f32 0.0, %v336
    %v338 = vpop.f32.mrf.mxu0
    %339 = vdwg.mxu0
    %v404 = vunpack.c.l.b16 %v231
    %v405 = vunpack.c.h.b16 %v231
    %v406 = vunpack.c.l.b16 %v232
    %v407 = vunpack.c.h.b16 %v232
    %v408 = vunpack.c.l.b16 %v233
    %v409 = vunpack.c.h.b16 %v233
    %v410 = vunpack.c.l.b16 %v234
    %v411 = vunpack.c.h.b16 %v234
    %v412 = vunpack.c.l.b16 %v235
    %v413 = vunpack.c.h.b16 %v235
    %v414 = vunpack.c.l.b16 %v236
    %v415 = vunpack.c.h.b16 %v236
    %v416 = vunpack.c.l.b16 %v237
    %v417 = vunpack.c.h.b16 %v237
    %v418 = vunpack.c.l.b16 %v238
    %v419 = vunpack.c.h.b16 %v238
    %v420 = vunpack.c.l.b16 %v239
    %v421 = vunpack.c.h.b16 %v239
    %v422 = vunpack.c.l.b16 %v240
    %v423 = vunpack.c.h.b16 %v240
    %v424 = vunpack.c.l.b16 %v241
    %v425 = vunpack.c.h.b16 %v241
    %v426 = vunpack.c.l.b16 %v242
    %v427 = vunpack.c.h.b16 %v242
    %v428 = vunpack.c.l.b16 %v243
    %v429 = vunpack.c.h.b16 %v243
    %v430 = vunpack.c.l.b16 %v244
    %v431 = vunpack.c.h.b16 %v244
    %v432 = vunpack.c.l.b16 %v245
    %v433 = vunpack.c.h.b16 %v245
    %v434 = vunpack.c.l.b16 %v246
    %v435 = vunpack.c.h.b16 %v246
    %v436 = vunpack.c.l.b16 %v247
    %v437 = vunpack.c.h.b16 %v247
    %v438 = vunpack.c.l.b16 %v248
    %v439 = vunpack.c.h.b16 %v248
    %v440 = vunpack.c.l.b16 %v249
    %v441 = vunpack.c.h.b16 %v249
    %v442 = vunpack.c.l.b16 %v250
    %v443 = vunpack.c.h.b16 %v250
    %v444 = vunpack.c.l.b16 %v251
    %v445 = vunpack.c.h.b16 %v251
    %v446 = vunpack.c.l.b16 %v252
    %v447 = vunpack.c.h.b16 %v252
    %v448 = vunpack.c.l.b16 %v253
    %v449 = vunpack.c.h.b16 %v253
    %v450 = vunpack.c.l.b16 %v254
    %v451 = vunpack.c.h.b16 %v254
    %v452 = vunpack.c.l.b16 %v255
    %v453 = vunpack.c.h.b16 %v255
    %v454 = vunpack.c.l.b16 %v256
    %v455 = vunpack.c.h.b16 %v256
    %v456 = vunpack.c.l.b16 %v257
    %v457 = vunpack.c.h.b16 %v257
    %v458 = vunpack.c.l.b16 %v258
    %v459 = vunpack.c.h.b16 %v258
    %v460 = vunpack.c.l.b16 %v259
    %v461 = vunpack.c.h.b16 %v259
    %v462 = vunpack.c.l.b16 %v260
    %v463 = vunpack.c.h.b16 %v260
    %v464 = vunpack.c.l.b16 %v261
    %v465 = vunpack.c.h.b16 %v261
    %v466 = vunpack.c.l.b16 %v262
    %v467 = vunpack.c.h.b16 %v262
    %v468 = vunpack.c.l.b16 %v263
    %v469 = vunpack.c.h.b16 %v263
    %v470 = vunpack.c.l.b16 %v264
    %v471 = vunpack.c.h.b16 %v264
    %v472 = vunpack.c.l.b16 %v265
    %v473 = vunpack.c.h.b16 %v265
    %v474 = vunpack.c.l.b16 %v266
    %v475 = vunpack.c.h.b16 %v266
    %v476 = vunpack.c.l.b16 %v267
    %v477 = vunpack.c.h.b16 %v267
    %v478 = vunpack.c.l.b16 %v268
    %v479 = vunpack.c.h.b16 %v268
    %v480 = vunpack.c.l.b16 %v269
    %v481 = vunpack.c.h.b16 %v269
    %v482 = vunpack.c.l.b16 %v270
    %v483 = vunpack.c.h.b16 %v270
    %v484 = vunpack.c.l.b16 %v271
    %v485 = vunpack.c.h.b16 %v271
    %v486 = vunpack.c.l.b16 %v272
    %v487 = vunpack.c.h.b16 %v272
    %v488 = vunpack.c.l.b16 %v273
    %v489 = vunpack.c.h.b16 %v273
    %v490 = vunpack.c.l.b16 %v274
    %v491 = vunpack.c.h.b16 %v274
    %v492 = vunpack.c.l.b16 %v275
    %v493 = vunpack.c.h.b16 %v275
    %v494 = vunpack.c.l.b16 %v276
    %v495 = vunpack.c.h.b16 %v276
    %v496 = vunpack.c.l.b16 %v277
    %v497 = vunpack.c.h.b16 %v277
    %v498 = vunpack.c.l.b16 %v278
    %v499 = vunpack.c.h.b16 %v278
    %v500 = vunpack.c.l.b16 %v279
    %v501 = vunpack.c.h.b16 %v279
    %v502 = vunpack.c.l.b16 %v280
    %v503 = vunpack.c.h.b16 %v280
    %v504 = vunpack.c.l.b16 %v281
    %v505 = vunpack.c.h.b16 %v281
    %v506 = vunpack.c.l.b16 %v282
    %v507 = vunpack.c.h.b16 %v282
    %v508 = vunpack.c.l.b16 %v283
    %v509 = vunpack.c.h.b16 %v283
    %v510 = vunpack.c.l.b16 %v284
    %v511 = vunpack.c.h.b16 %v284
    %v512 = vunpack.c.l.b16 %v285
    %v513 = vunpack.c.h.b16 %v285
    %v514 = vunpack.c.l.b16 %v286
    %v515 = vunpack.c.h.b16 %v286
    %v516 = vunpack.c.l.b16 %v287
    %v517 = vunpack.c.h.b16 %v287
    %v518 = vunpack.c.l.b16 %v288
    %v519 = vunpack.c.h.b16 %v288
    %v520 = vunpack.c.l.b16 %v289
    %v521 = vunpack.c.h.b16 %v289
    %v522 = vunpack.c.l.b16 %v290
    %v523 = vunpack.c.h.b16 %v290
    %v524 = vunpack.c.l.b16 %v291
    %v525 = vunpack.c.h.b16 %v291
    %v526 = vunpack.c.l.b16 %v292
    %v527 = vunpack.c.h.b16 %v292
    %v528 = vunpack.c.l.b16 %v293
    %v529 = vunpack.c.h.b16 %v293
    %v530 = vunpack.c.l.b16 %v294
    %v531 = vunpack.c.h.b16 %v294
    %v532 = vpack.c.b16 %v406, %v404
    %v533 = vpack.c.b16 %v407, %v405
    %v534 = vpack.c.b16 %v410, %v408
    %v535 = vpack.c.b16 %v411, %v409
    %v536 = vpack.c.b16 %v414, %v412
    %v537 = vpack.c.b16 %v415, %v413
    %v538 = vpack.c.b16 %v418, %v416
    %v539 = vpack.c.b16 %v419, %v417
    %v540 = vpack.c.b16 %v422, %v420
    %v541 = vpack.c.b16 %v423, %v421
    %v542 = vpack.c.b16 %v426, %v424
    %v543 = vpack.c.b16 %v427, %v425
    %v544 = vpack.c.b16 %v430, %v428
    %v545 = vpack.c.b16 %v431, %v429
    %v546 = vpack.c.b16 %v434, %v432
    %v547 = vpack.c.b16 %v435, %v433
    %v548 = vpack.c.b16 %v438, %v436
    %v549 = vpack.c.b16 %v439, %v437
    %v550 = vpack.c.b16 %v442, %v440
    %v551 = vpack.c.b16 %v443, %v441
    %v552 = vpack.c.b16 %v446, %v444
    %v553 = vpack.c.b16 %v447, %v445
    %v554 = vpack.c.b16 %v450, %v448
    %v555 = vpack.c.b16 %v451, %v449
    %v556 = vpack.c.b16 %v454, %v452
    %v557 = vpack.c.b16 %v455, %v453
    %v558 = vpack.c.b16 %v458, %v456
    %v559 = vpack.c.b16 %v459, %v457
    %v560 = vpack.c.b16 %v462, %v460
    %v561 = vpack.c.b16 %v463, %v461
    %v562 = vpack.c.b16 %v466, %v464
    %v563 = vpack.c.b16 %v467, %v465
    %v564 = vpack.c.b16 %v470, %v468
    %v565 = vpack.c.b16 %v471, %v469
    %v566 = vpack.c.b16 %v474, %v472
    %v567 = vpack.c.b16 %v475, %v473
    %v568 = vpack.c.b16 %v478, %v476
    %v569 = vpack.c.b16 %v479, %v477
    %v570 = vpack.c.b16 %v482, %v480
    %v571 = vpack.c.b16 %v483, %v481
    %v572 = vpack.c.b16 %v486, %v484
    %v573 = vpack.c.b16 %v487, %v485
    %v574 = vpack.c.b16 %v490, %v488
    %v575 = vpack.c.b16 %v491, %v489
    %v576 = vpack.c.b16 %v494, %v492
    %v577 = vpack.c.b16 %v495, %v493
    %v578 = vpack.c.b16 %v498, %v496
    %v579 = vpack.c.b16 %v499, %v497
    %v580 = vpack.c.b16 %v502, %v500
    %v581 = vpack.c.b16 %v503, %v501
    %v582 = vpack.c.b16 %v506, %v504
    %v583 = vpack.c.b16 %v507, %v505
    %v584 = vpack.c.b16 %v510, %v508
    %v585 = vpack.c.b16 %v511, %v509
    %v586 = vpack.c.b16 %v514, %v512
    %v587 = vpack.c.b16 %v515, %v513
    %v588 = vpack.c.b16 %v518, %v516
    %v589 = vpack.c.b16 %v519, %v517
    %v590 = vpack.c.b16 %v522, %v520
    %v591 = vpack.c.b16 %v523, %v521
    %v592 = vpack.c.b16 %v526, %v524
    %v593 = vpack.c.b16 %v527, %v525
    %v594 = vpack.c.b16 %v530, %v528
    %v595 = vpack.c.b16 %v531, %v529
    %660 = vmatpush.bf16.msra.mxu0 %v546
    %661 = vmatpush.bf16.msra.mxu0 %v544
    %662 = vmatpush.bf16.msra.mxu0 %v542
    %663 = vmatpush.bf16.msra.mxu0 %v540
    %664 = vmatpush.bf16.msra.mxu0 %v538
    %665 = vmatpush.bf16.msra.mxu0 %v536
    %666 = vmatpush.bf16.msra.mxu0 %v534
    %667 = vmatpush.bf16.msra.mxu0 %v532
    %668 = vmatmul.bf16.gmra.mxu0 %v227
    %v669 = vpop.f32.mrf.mxu0
    %v670 = vadd.f32 %v324, %v669
    %v671 = vpop.f32.mrf.mxu0
    %672 = vdwg.mxu0
    %673 = vmatpush.bf16.msra.mxu0 %v562
    %674 = vmatpush.bf16.msra.mxu0 %v560
    %675 = vmatpush.bf16.msra.mxu0 %v558
    %676 = vmatpush.bf16.msra.mxu0 %v556
    %677 = vmatpush.bf16.msra.mxu0 %v554
    %678 = vmatpush.bf16.msra.mxu0 %v552
    %679 = vmatpush.bf16.msra.mxu0 %v550
    %680 = vmatpush.bf16.msra.mxu0 %v548
    %681 = vmatmul.bf16.gmra.mxu0 %v228
    %v682 = vpop.f32.mrf.mxu0
    %v683 = vadd.f32 %v670, %v682
    %v684 = vpop.f32.mrf.mxu0
    %685 = vdwg.mxu0
    %686 = vmatpush.bf16.msra.mxu0 %v578
    %687 = vmatpush.bf16.msra.mxu0 %v576
    %688 = vmatpush.bf16.msra.mxu0 %v574
    %689 = vmatpush.bf16.msra.mxu0 %v572
    %690 = vmatpush.bf16.msra.mxu0 %v570
    %691 = vmatpush.bf16.msra.mxu0 %v568
    %692 = vmatpush.bf16.msra.mxu0 %v566
    %693 = vmatpush.bf16.msra.mxu0 %v564
    %694 = vmatmul.bf16.gmra.mxu0 %v229
    %v695 = vpop.f32.mrf.mxu0
    %v696 = vadd.f32 %v683, %v695
    %v697 = vpop.f32.mrf.mxu0
    %698 = vdwg.mxu0
    %699 = vmatpush.bf16.msra.mxu0 %v594
    %700 = vmatpush.bf16.msra.mxu0 %v592
    %701 = vmatpush.bf16.msra.mxu0 %v590
    %702 = vmatpush.bf16.msra.mxu0 %v588
    %703 = vmatpush.bf16.msra.mxu0 %v586
    %704 = vmatpush.bf16.msra.mxu0 %v584
    %705 = vmatpush.bf16.msra.mxu0 %v582
    %706 = vmatpush.bf16.msra.mxu0 %v580
    %707 = vmatmul.bf16.gmra.mxu0 %v230
    %v708 = vpop.f32.mrf.mxu0
    %v709 = vadd.f32 %v696, %v708
    %v710 = vpop.f32.mrf.mxu0
    %711 = vdwg.mxu0
    %712 = vmatpush.bf16.msra.mxu0 %v547
    %713 = vmatpush.bf16.msra.mxu0 %v545
    %714 = vmatpush.bf16.msra.mxu0 %v543
    %715 = vmatpush.bf16.msra.mxu0 %v541
    %716 = vmatpush.bf16.msra.mxu0 %v539
    %717 = vmatpush.bf16.msra.mxu0 %v537
    %718 = vmatpush.bf16.msra.mxu0 %v535
    %719 = vmatpush.bf16.msra.mxu0 %v533
    %720 = vmatmul.bf16.gmra.mxu0 %v227
    %v721 = vpop.f32.mrf.mxu0
    %v722 = vadd.f32 %v337, %v721
    %v723 = vpop.f32.mrf.mxu0
    %724 = vdwg.mxu0
    %725 = vmatpush.bf16.msra.mxu0 %v563
    %726 = vmatpush.bf16.msra.mxu0 %v561
    %727 = vmatpush.bf16.msra.mxu0 %v559
    %728 = vmatpush.bf16.msra.mxu0 %v557
    %729 = vmatpush.bf16.msra.mxu0 %v555
    %730 = vmatpush.bf16.msra.mxu0 %v553
    %731 = vmatpush.bf16.msra.mxu0 %v551
    %732 = vmatpush.bf16.msra.mxu0 %v549
    %733 = vmatmul.bf16.gmra.mxu0 %v228
    %v734 = vpop.f32.mrf.mxu0
    %v735 = vadd.f32 %v722, %v734
    %v736 = vpop.f32.mrf.mxu0
    %737 = vdwg.mxu0
    %738 = vmatpush.bf16.msra.mxu0 %v579
    %739 = vmatpush.bf16.msra.mxu0 %v577
    %740 = vmatpush.bf16.msra.mxu0 %v575
    %741 = vmatpush.bf16.msra.mxu0 %v573
    %742 = vmatpush.bf16.msra.mxu0 %v571
    %743 = vmatpush.bf16.msra.mxu0 %v569
    %744 = vmatpush.bf16.msra.mxu0 %v567
    %745 = vmatpush.bf16.msra.mxu0 %v565
    %746 = vmatmul.bf16.gmra.mxu0 %v229
    %v747 = vpop.f32.mrf.mxu0
    %v748 = vadd.f32 %v735, %v747
    %v749 = vpop.f32.mrf.mxu0
    %750 = vdwg.mxu0
    %751 = vmatpush.bf16.msra.mxu0 %v595
    %752 = vmatpush.bf16.msra.mxu0 %v593
    %753 = vmatpush.bf16.msra.mxu0 %v591
    %754 = vmatpush.bf16.msra.mxu0 %v589
    %755 = vmatpush.bf16.msra.mxu0 %v587
    %756 = vmatpush.bf16.msra.mxu0 %v585
    %757 = vmatpush.bf16.msra.mxu0 %v583
    %758 = vmatpush.bf16.msra.mxu0 %v581
    %759 = vmatmul.bf16.gmra.mxu0 %v230
    %v760 = vpop.f32.mrf.mxu0
    %v761 = vadd.f32 %v748, %v760
    %v762 = vpop.f32.mrf.mxu0
    %763 = vdwg.mxu0
    %v764 = vld [vmem:[%s6] sm:$0x3]
    %v766 = vperm.slane %v764, 0
    %v767 = vperm.slane %v764, 1
    %v770 = vadd.f32 %v709, %v766
    %v771 = vadd.f32 %v761, %v767
    %v772 = vmax.f32 %v770, 0.0
    %v773 = vmax.f32 %v771, 0.0
    %v774 = vld [vmem:[%s7] sm:$0x3]
    %v776 = vperm.slane %v774, 0
    %v777 = vperm.slane %v774, 1
    %v780 = vmul.f32 %v772, %v776
    %v781 = vmul.f32 %v773, %v777
    %v782 = vadd.f32 %v780, %v781
    %783 = vadd.xlane.f32.xlu0 %v782
    %v784 = vpop.xlane.xlu0 %783
    %s785 = sld [smem:[#allocation2]]
    %v786 = vstv %s785
    %v787 = vadd.f32 %v784, %v786
    %v789 = vlaneseq
    %v790 = vand.u32 %v789, 127
    %v791 = vperm.slane %v787, %v790
    %vm793 = vcmask 57344
    %794 = vst.msk [vmem:[#allocation12] sm:$0x1] %vm793, %v791
    // Predicated region
    $region58: #{tpu_custom_call.1} parent=1 // pred_check
      _
    $region59: #{tpu_custom_call.1} parent=1 // pred_check_branch
      %796 = sbr.rel (0) target = $region61
    $region60: #{tpu_custom_call.1} parent=1 // pred_region
      %798 = vsyncadd [#allocation5], 0
      %s800 = sshll.u32 [#allocation12], 4
      %s801 = int_to_ptr.vmem [resolvable:$true] %s800
      %s802 = sshll.u32 %s9, 4
      %s803 = int_to_ptr.hbm [resolvable:$true] %s802
      %805 = dma.vmem_to_hbm [thread:$0]  %s801, 16, %s803, [#allocation5]
    $region61: #{tpu_custom_call.1} parent=1 // pred_fallthru
      _
    // Predicated region
    $region62: #{tpu_custom_call.1} parent=1 // pred_check
      _
    $region63: #{tpu_custom_call.1} parent=1 // pred_check_branch
      %807 = sbr.rel (0) target = $region65
    $region64: #{tpu_custom_call.1} parent=1 // pred_region
      %809 = dma.done [#allocation5], 16
    $region65: #{tpu_custom_call.1} parent=1 // pred_fallthru
      _
    %810 = vsyncpa [#allocation4], 1
    %811 = vsyncpa [#allocation7], 1
    %812 = vsyncpa [#allocation10], 1
    %813 = vsyncpa [#allocation5], 1

</llo_original>
